<compile_context>
chip_gen: v7x
topology: tpu7x:2x2x1
jax: 0.10.0
libtpu: 0.0.40
codegen_flags: <defaults>
</compile_context>

<pallas_src>
import jax
import jax.numpy as jnp
from jax.experimental import pallas as pl
from jax.experimental.pallas import tpu as pltpu


# ---------------------------------------------------------------------------
# Kernel 1: conditioning path  (SiLU -> Linear), weight streamed in col tiles
# ---------------------------------------------------------------------------
def conditioning_kernel(emb_ref, w_ref, b_ref, proj_ref):
    emb = emb_ref[...].astype(jnp.float32)             # (B, D), tiny; same block every step
    e = emb * jax.nn.sigmoid(emb)                      # SiLU in f32 (VPU/EUP, negligible)
    w = w_ref[...]                                     # (D, TN) tile, native dtype (bf16 MXU fast path)
    acc = jnp.dot(e.astype(w.dtype), w,
                  preferred_element_type=jnp.float32)  # (B, TN), f32 accumulation
    proj_ref[...] = acc + b_ref[...].astype(jnp.float32)


# ---------------------------------------------------------------------------
# Kernel 2: streaming LayerNorm(no affine, eps=1e-6) + modulation over x tiles
# ---------------------------------------------------------------------------
def modulate_kernel(x_ref, scale1_ref, shift_ref, o_ref):
    # Masked tail block: OOB rows contain garbage but all math is per-row
    # (reduction along D only) and their stores are dropped, so it is safe.
    xf = x_ref[...].astype(jnp.float32)                # (1, TS, D); f32 stats
    mean = jnp.mean(xf, axis=-1, keepdims=True)
    centered = xf - mean                               # computed once, reused
    var = jnp.mean(centered * centered, axis=-1, keepdims=True)
    xn = centered * jax.lax.rsqrt(var + 1e-6)
    o_ref[...] = (xn * scale1_ref[...] + shift_ref[...]).astype(o_ref.dtype)


# ---------------------------------------------------------------------------
# Tile pickers
# ---------------------------------------------------------------------------
def _pick_col_tile(N):
    """Column tile for streaming the (D, 6D) weight.  Full block when small,
    otherwise a 128-multiple; ragged tail handled by cdiv + masked edge."""
    if N <= 1024:
        return N
    return 512


def _pick_seq_tile(S, D, x_itemsize, vmem_budget_bytes=12 * 1024 * 1024):
    """Byte-budgeted sequence tile.
    Resident per step ~= 2 input + 2 output pipeline buffers + ~2 tile-sized
    f32 temps ~= (4*itemsize + 8) * TS * D bytes.  A 12 MiB budget stays under
    the default scoped-VMEM limit on every generation (16 MiB v5e,
    32 MiB v6e/v7x, and well under v7x's 64 MiB physical) with no
    vmem_limit_bytes override needed."""
    per_row = (4 * x_itemsize + 8) * D
    ts = vmem_budget_bytes // per_row
    if ts >= S:
        return S                                   # full-S block (full dim always legal)
    ts = max(8, (min(ts, 2048) // 8) * 8)          # < S: must be a multiple of 8 sublanes
    return ts


# ---------------------------------------------------------------------------
# Wrapper
# ---------------------------------------------------------------------------
def ada_layer_norm_zero(x, emb, w_t, bias):
    """x: (B, S, D); emb: (B, D); w_t: (D, 6D) (= torch weight.T); bias: (6D,)."""
    B, S, D = x.shape
    N = 6 * D
    # TODO(synk): if D is not a multiple of 128, pad D in the wrapper so the
    # last-dim stores are unmasked (lane-dense vst); typical DiT dims are fine.

    # ---- conditioning pass: weight streamed, one (B, 6D) f32 proj output ----
    TN = _pick_col_tile(N)
    n_col = pl.cdiv(N, TN)
    proj = pl.pallas_call(
        conditioning_kernel,
        grid=(n_col,),
        in_specs=[
            pl.BlockSpec((B, D), lambda j: (0, 0)),        # emb: same block, no re-DMA
            pl.BlockSpec((D, TN), lambda j: (0, j)),       # weight column tile
            pl.BlockSpec((1, TN), lambda j: (0, j)),       # bias column tile
        ],
        out_specs=pl.BlockSpec((B, TN), lambda j: (0, j)),
        out_shape=jax.ShapeDtypeStruct((B, N), jnp.float32),
        compiler_params=pltpu.CompilerParams(
            dimension_semantics=("parallel",)),
    )(emb, w_t, bias.reshape(1, N))

    # Tiny XLA ops: 6-way chunk + (1 + scale_msa) fold + reshape for broadcast.
    shift_msa = proj[:, 0 * D:1 * D].reshape(B, 1, D)                  # f32
    scale1_msa = (1.0 + proj[:, 1 * D:2 * D]).reshape(B, 1, D)          # f32
    # Note: gates/mlp params cast to emb.dtype (matches single-dtype PyTorch use).
    gate_msa = proj[:, 2 * D:3 * D].astype(emb.dtype)
    shift_mlp = proj[:, 3 * D:4 * D].astype(emb.dtype)
    scale_mlp = proj[:, 4 * D:5 * D].astype(emb.dtype)
    gate_mlp = proj[:, 5 * D:6 * D].astype(emb.dtype)

    # ---- streaming pass: flattened (B * n_s) parallel grid, seq innermost ----
    TS = _pick_seq_tile(S, D, jnp.dtype(x.dtype).itemsize)
    n_s = pl.cdiv(S, TS)

    x_out = pl.pallas_call(
        modulate_kernel,
        grid=(B * n_s,),
        in_specs=[
            pl.BlockSpec((1, TS, D), lambda i: (i // n_s, i % n_s, 0)),
            pl.BlockSpec((1, 1, D), lambda i: (i // n_s, 0, 0)),   # refetched only at batch boundary
            pl.BlockSpec((1, 1, D), lambda i: (i // n_s, 0, 0)),
        ],
        out_specs=pl.BlockSpec((1, TS, D), lambda i: (i // n_s, i % n_s, 0)),
        out_shape=jax.ShapeDtypeStruct((B, S, D), x.dtype),
        compiler_params=pltpu.CompilerParams(
            dimension_semantics=("parallel",)),
    )(x, scale1_msa, shift_msa)

    return x_out, gate_msa, shift_mlp, scale_mlp, gate_mlp


# ---------------------------------------------------------------------------
# Reference + test
# ---------------------------------------------------------------------------
def _reference(x, emb, w_t, bias):
    e = emb * jax.nn.sigmoid(emb)
    proj = e @ w_t + bias
    D = x.shape[-1]
    shift_msa, scale_msa, gate_msa, shift_mlp, scale_mlp, gate_mlp = [
        proj[:, i * D:(i + 1) * D] for i in range(6)]
    mean = jnp.mean(x, axis=-1, keepdims=True)
    var = jnp.mean((x - mean) ** 2, axis=-1, keepdims=True)
    xn = (x - mean) * jax.lax.rsqrt(var + 1e-6)
    out = xn * (1.0 + scale_msa[:, None, :]) + shift_msa[:, None, :]
    return out, gate_msa, shift_mlp, scale_mlp, gate_mlp


if __name__ == "__main__":
    B, S, D = 2, 8, 32  # batch, seq, embedding_dim (small test shapes)

    key = jax.random.PRNGKey(0)
    kx, ke, kw, kb = jax.random.split(key, 4)

    x = jax.random.normal(kx, (B, S, D), dtype=jnp.float32)
    emb = jax.random.normal(ke, (B, D), dtype=jnp.float32)

    # Deterministic Linear(D, 6D) params (roughly PyTorch fan-in scale).
    bound = 1.0 / (D ** 0.5)
    w = jax.random.uniform(kw, (6 * D, D), minval=-bound, maxval=bound,
                           dtype=jnp.float32)           # torch layout (out, in)
    bias = jax.random.uniform(kb, (6 * D,), minval=-bound, maxval=bound,
                              dtype=jnp.float32)
    w_t = w.T                                            # (D, 6D) for the kernel

    outs = ada_layer_norm_zero(x, emb, w_t, bias)
    outs = jax.block_until_ready(outs)

    refs = _reference(x, emb, w_t, bias)
    for o, r in zip(outs, refs):
        assert o.shape == r.shape and o.dtype == r.dtype
        assert jnp.allclose(o, r, atol=1e-5, rtol=1e-5)

    print("KERNEL_OK")
</pallas_src>

<mosaic_0001>
module attributes {stable_mosaic.version = 11 : i64} {
  func.func @conditioning_kernel(%arg0: i32, %arg1: memref<2x32xf32, #tpu.memory_space<vmem>>, %arg2: memref<32x192xf32, #tpu.memory_space<vmem>>, %arg3: memref<1x192xf32, #tpu.memory_space<vmem>>, %arg4: memref<2x192xf32, #tpu.memory_space<vmem>>) attributes {dimension_semantics = [#tpu.dimension_semantics<parallel>], iteration_bounds = array<i64: 1>, scalar_prefetch = 0 : i64, scratch_operands = 0 : i64, tpu.core_type = #tpu.core_type<tc>, window_params = [{pipeline_mode = #tpu.pipeline_mode<synchronous>, transform_indices = @transform_0, window_bounds = array<i64: 2, 32>}, {transform_indices = @transform_1, window_bounds = array<i64: 32, 192>}, {transform_indices = @transform_2, window_bounds = array<i64: 1, 192>}, {transform_indices = @transform_3, window_bounds = array<i64: 2, 192>}]} {
    %c0 = arith.constant 0 : index
    %c0_0 = arith.constant 0 : index
    %0 = vector.load %arg1[%c0, %c0_0] : memref<2x32xf32, #tpu.memory_space<vmem>>, vector<2x32xf32>
    %1 = arith.negf %0 : vector<2x32xf32>
    %2 = math.exp %1 : vector<2x32xf32>
    %cst = arith.constant 1.000000e+00 : f32
    %3 = vector.broadcast %cst : f32 to vector<2x32xf32>
    %4 = arith.addf %3, %2 : vector<2x32xf32>
    %5 = arith.divf %3, %4 : vector<2x32xf32>
    %6 = arith.mulf %0, %5 : vector<2x32xf32>
    %c0_1 = arith.constant 0 : index
    %c0_2 = arith.constant 0 : index
    %7 = vector.load %arg2[%c0_1, %c0_2] : memref<32x192xf32, #tpu.memory_space<vmem>>, vector<32x192xf32>
    %cst_3 = arith.constant dense<0.000000e+00> : vector<2x192xf32>
    %8 = tpu.matmul %6, %7, %cst_3 {dimension_numbers = #tpu.dot_dimension_numbers<[1], [0], [0], [1], [0, 0, 1, 1], [], []>} : vector<2x32xf32>, vector<32x192xf32>, vector<2x192xf32> -> vector<2x192xf32>
    %c0_4 = arith.constant 0 : index
    %c0_5 = arith.constant 0 : index
    %9 = vector.load %arg3[%c0_4, %c0_5] : memref<1x192xf32, #tpu.memory_space<vmem>>, vector<1x192xf32>
    %10 = vector.broadcast %9 : vector<1x192xf32> to vector<2x192xf32>
    %11 = arith.addf %8, %10 : vector<2x192xf32>
    %c0_6 = arith.constant 0 : index
    %c0_7 = arith.constant 0 : index
    %12 = vector.load %arg4[%c0_6, %c0_7] : memref<2x192xf32, #tpu.memory_space<vmem>>, vector<2x192xf32>
    tpu.vector_store %arg4[%c0_6, %c0_7], %11 {strides = array<i32>} : memref<2x192xf32, #tpu.memory_space<vmem>>, vector<2x192xf32>,
    return
  }
  func.func @transform_0(%arg0: i32) -> (i32, i32) {
    %c0_i32 = arith.constant 0 : i32
    %c0_i32_0 = arith.constant 0 : i32
    %c0_i32_1 = arith.constant 0 : i32
    return %c0_i32, %c0_i32_0 : i32, i32
  }
  func.func @transform_1(%arg0: i32) -> (i32, i32) {
    %c0_i32 = arith.constant 0 : i32
    %c0_i32_0 = arith.constant 0 : i32
    return %c0_i32, %arg0 : i32, i32
  }
  func.func @transform_2(%arg0: i32) -> (i32, i32) {
    %c0_i32 = arith.constant 0 : i32
    %c0_i32_0 = arith.constant 0 : i32
    return %c0_i32, %arg0 : i32, i32
  }
  func.func @transform_3(%arg0: i32) -> (i32, i32) {
    %c0_i32 = arith.constant 0 : i32
    %c0_i32_0 = arith.constant 0 : i32
    return %c0_i32, %arg0 : i32, i32
  }
}

</mosaic_0001>

<llo_original>
// kernel: tpu_custom_call.1
$region0: #{tpu_custom_call.1}
  #allocation0 [shape = 'u32[]', space=smem, size = 0x4, offset = 0x4, fixed_abs, tag = 'smem constant byte address 0x4 - core index']
  #allocation1 [shape = 'u32[144,128]{1,0:T(1,128)}', space=vmem, size = 0x12000, scoped, tag = 'internal scratch']
  %s0 = inlined_call_operand.hbm [shape: f32[2,32], index: 0, kind: input, shape index: {}]
  %s1 = inlined_call_operand.hbm [shape: f32[32,192], index: 1, kind: input, shape index: {}]
  %s2 = inlined_call_operand.vmem [shape: f32[1,192], index: 2, kind: input, shape index: {}]
  %s3 = inlined_call_operand.hbm [shape: f32[2,192], index: 3, kind: output, shape index: {}]
  %s4 = sld [smem:[#allocation0]]
  $region30: #{tpu_custom_call.1} parent=0
    _
  %s6 = ssub.s32 1, %s4
  %s7 = scalar_select 0, %s6, %s4
  $region1: #{tpu_custom_call.1} parent=0
    #allocation2 [shape = 'u8[1024]{0}', space=vmem, size = 0x400, scoped, tag = 'input window, operand 0, single buffered']
    #allocation3 [shape = 's32[1]{0}', space=sflag, size = 0x4, scoped, tag = 'scoped memory for tpu_custom_call.1']
    #allocation4 [shape = 's32[1]{0}', space=sflag, size = 0x4, scoped, tag = 'scoped memory for tpu_custom_call.1']
    #allocation5 [shape = 'u8[32768]{0}', space=vmem, size = 0x8000, scoped, tag = 'input window, operand 1, single buffered']
    #allocation6 [shape = 's32[1]{0}', space=sflag, size = 0x4, scoped, tag = 'scoped memory for tpu_custom_call.1']
    #allocation7 [shape = 'u8[2048]{0}', space=vmem, size = 0x800, scoped, tag = 'output window, operand 0, single buffered']
    %8 = vsyncpa [#allocation3], 0
    %9 = vsyncpa [#allocation6], 0
    %10 = vsyncpa [#allocation4], 0
    // Predicated region
    $region2: #{tpu_custom_call.1} parent=1 // pred_check
      _
    $region3: #{tpu_custom_call.1} parent=1 // pred_check_branch
      %12 = sbr.rel (0) target = $region5
    $region4: #{tpu_custom_call.1} parent=1 // pred_region
      %s14 = ssub.s32 32, 32
      %15 = vsyncadd [#allocation3], %s14
      %s17 = sshll.u32 [#allocation2], 4
      %s18 = int_to_ptr.vmem [resolvable:$true] %s17
      %20 = dma.hbm_to_vmem [thread:$0]  %s0, 32, %s18, [#allocation3]
    $region5: #{tpu_custom_call.1} parent=1 // pred_fallthru
      _
    // Predicated region
    $region6: #{tpu_custom_call.1} parent=1 // pred_check
      _
    $region7: #{tpu_custom_call.1} parent=1 // pred_check_branch
      %22 = sbr.rel (0) target = $region9
    $region8: #{tpu_custom_call.1} parent=1 // pred_region
      %s24 = ssub.s32 1024, 1024
      %25 = vsyncadd [#allocation6], %s24
      %s26 = sshll.u32 [#allocation5], 4
      %s27 = int_to_ptr.vmem [resolvable:$true] %s26
      %32 = dma.hbm_to_vmem [thread:$0]  %s1, 1024, %s27, [#allocation6], 256, 256, 16
    $region9: #{tpu_custom_call.1} parent=1 // pred_fallthru
      _
    // Predicated region
    $region10: #{tpu_custom_call.1} parent=1 // pred_check
      _
    $region11: #{tpu_custom_call.1} parent=1 // pred_check_branch
      %34 = sbr.rel (0) target = $region13
    $region12: #{tpu_custom_call.1} parent=1 // pred_region
      _
    $region13: #{tpu_custom_call.1} parent=1 // pred_fallthru
      _
    // Predicated region
    $region14: #{tpu_custom_call.1} parent=1 // pred_check
      _
    $region15: #{tpu_custom_call.1} parent=1 // pred_check_branch
      %36 = sbr.rel (0) target = $region17
    $region16: #{tpu_custom_call.1} parent=1 // pred_region
      %37 = dma.done [#allocation3], 32
    $region17: #{tpu_custom_call.1} parent=1 // pred_fallthru
      _
    // Predicated region
    $region18: #{tpu_custom_call.1} parent=1 // pred_check
      _
    $region19: #{tpu_custom_call.1} parent=1 // pred_check_branch
      %39 = sbr.rel (0) target = $region21
    $region20: #{tpu_custom_call.1} parent=1 // pred_region
      %40 = dma.done [#allocation6], 1024
    $region21: #{tpu_custom_call.1} parent=1 // pred_fallthru
      _
    %v41 = vld [vmem:[#allocation2] sm:$0x3]
    %v42 = vxor.u32 %v41, 2147483648
    %v43 = vmul.f32 %v42, 1.442695
    %v44 = vpow.pop %v43
    %v45 = vadd.f32 %v44, 1.0
    %v46 = vrcp.pop %v45
    %v47 = vmul.f32 1.0, %v46
    %v48 = vmul.f32 %v41, %v47
    %v49 = vld [vmem:[#allocation5] sm:$0xff]
    %v50 = vld [vmem:[#allocation5 + $0x8] sm:$0xff]
    %v51 = vld [vmem:[#allocation5 + $0x10] sm:$0xff]
    %v52 = vld [vmem:[#allocation5 + $0x18] sm:$0xff]
    %v53 = vld [vmem:[#allocation5 + $0x20] sm:$0xff]
    %v54 = vld [vmem:[#allocation5 + $0x28] sm:$0xff]
    %v55 = vld [vmem:[#allocation5 + $0x30] sm:$0xff]
    %v56 = vld [vmem:[#allocation5 + $0x38] sm:$0xff]
    %v57 = vld [vmem:[%s2] sm:$0x3]
    %v59 = vlaneseq
    %v60 = vshrl.u32 %v59, 7
    %v61 = vsub.s32 0, %v60
    %v62 = vrot.slane %v57, %v61
    %v63 = vlaneseq
    %v64 = vshrl.u32 %v63, 7
    %v65 = vsub.s32 1, %v64
    %v66 = vrot.slane %v57, %v65
    %vm69 = vcmask 261120
    %v71 = vsel %vm69, %v48, 0
    %73 = vmatprep.subr.mxu0 %v50
    %74 = vmatpush1.msra.mxu0 %v49
    %75 = vmatprep.subr.mxu0 %v52
    %76 = vmatpush1.msra.mxu0 %v51
    %77 = vmatprep.subr.mxu0 %v54
    %78 = vmatpush1.msra.mxu0 %v53
    %79 = vmatprep.subr.mxu0 %v56
    %80 = vmatpush1.msra.mxu0 %v55
    %81 = vmatprep.subr.mxu0 0.0
    %82 = vmatpush1.msra.mxu0 0.0
    %83 = vmatprep.subr.mxu0 0.0
    %84 = vmatpush1.msra.mxu0 0.0
    %85 = vmatprep.subr.mxu0 0.0
    %86 = vmatpush1.msra.mxu0 0.0
    %87 = vmatprep.subr.mxu0 0.0
    %88 = vmatpush1.msra.mxu0 0.0
    %89 = vmatprep.subr.mxu0 0.0
    %90 = vmatpush1.msra.mxu0 0.0
    %91 = vmatprep.subr.mxu0 0.0
    %92 = vmatpush1.msra.mxu0 0.0
    %93 = vmatprep.subr.mxu0 0.0
    %94 = vmatpush1.msra.mxu0 0.0
    %95 = vmatprep.subr.mxu0 0.0
    %96 = vmatpush1.msra.mxu0 0.0
    %97 = vmatprep.subr.mxu0 0.0
    %98 = vmatpush1.msra.mxu0 0.0
    %99 = vmatprep.subr.mxu0 0.0
    %100 = vmatpush1.msra.mxu0 0.0
    %101 = vmatprep.subr.mxu0 0.0
    %102 = vmatpush1.msra.mxu0 0.0
    %103 = vmatprep.subr.mxu0 0.0
    %104 = vmatpush1.msra.mxu0 0.0
    %105 = vmatprep.subr.mxu0 0.0
    %106 = vmatpush1.msra.mxu0 0.0
    %107 = vmatprep.subr.mxu0 0.0
    %108 = vmatpush1.msra.mxu0 0.0
    %109 = vmatprep.subr.mxu0 0.0
    %110 = vmatpush1.msra.mxu0 0.0
    %111 = vmatprep.subr.mxu0 0.0
    %112 = vmatpush1.msra.mxu0 0.0
    %113 = vmatprep.subr.mxu0 0.0
    %114 = vmatpush1.msra.mxu0 0.0
    %115 = vmatprep.subr.mxu0 0.0
    %116 = vmatpush1.msra.mxu0 0.0
    %117 = vmatprep.subr.mxu0 0.0
    %118 = vmatpush1.msra.mxu0 0.0
    %119 = vmatprep.subr.mxu0 0.0
    %120 = vmatpush1.msra.mxu0 0.0
    %121 = vmatprep.subr.mxu0 0.0
    %122 = vmatpush1.msra.mxu0 0.0
    %123 = vmatprep.subr.mxu0 0.0
    %124 = vmatpush1.msra.mxu0 0.0
    %125 = vmatprep.subr.mxu0 0.0
    %126 = vmatpush1.msra.mxu0 0.0
    %127 = vmatprep.subr.mxu0 0.0
    %128 = vmatpush1.msra.mxu0 0.0
    %129 = vmatprep.subr.mxu0 0.0
    %130 = vmatpush1.msra.mxu0 0.0
    %131 = vmatprep.subr.mxu0 0.0
    %132 = vmatpush1.msra.mxu0 0.0
    %133 = vmatprep.subr.mxu0 0.0
    %134 = vmatpush1.msra.mxu0 0.0
    %135 = vmatprep.subr.mxu0 0.0
    %136 = vmatpush1.msra.mxu0 0.0
    %137 = vmatprep.mubr.f32.mxu0 0.0
    %138 = vmatmul.mubr.f32.gmra.mrb[0].mxu0 %v71
    %v139 = vpop.f32.mrb[0].mxu0
    %v140 = vadd.f32 %v62, %v139
    %v141 = vpop.f32.mrb[0].mxu0
    %v142 = vadd.f32 %v66, %v141
    %143 = vdwg.mxu0
    %v146 = vcombine.low %v140, %v142
    %v148 = vunpack.c.l.s4 1983009808
    %v149 = vunpack.c.0.s8 %v148
    %v150 = vlaneseq
    %v151 = vshrl.u32 %v150, 7
    %v152 = vsub.s32 %v149, %v151
    %v153 = vrot.slane %v146, %v152
    %vm155 = vcmask 1041408
    %vm156 = vcmask 519170
    %vm157 = vmor %vm156, %vm155
    %158 = vst.msk [vmem:[#allocation7] sm:$0xf] %vm157, %v153
    // Predicated region
    $region22: #{tpu_custom_call.1} parent=1 // pred_check
      _
    $region23: #{tpu_custom_call.1} parent=1 // pred_check_branch
      %160 = sbr.rel (0) target = $region25
    $region24: #{tpu_custom_call.1} parent=1 // pred_region
      %s162 = ssub.s32 64, 64
      %163 = vsyncadd [#allocation4], %s162
      %s165 = sshll.u32 [#allocation7], 4
      %s166 = int_to_ptr.vmem [resolvable:$true] %s165
      %168 = dma.vmem_to_hbm [thread:$0]  %s166, 64, %s3, [#allocation4]
    $region25: #{tpu_custom_call.1} parent=1 // pred_fallthru
      _
    // Predicated region
    $region26: #{tpu_custom_call.1} parent=1 // pred_check
      _
    $region27: #{tpu_custom_call.1} parent=1 // pred_check_branch
      %170 = sbr.rel (0) target = $region29
    $region28: #{tpu_custom_call.1} parent=1 // pred_region
      %171 = dma.done [#allocation4], 64
    $region29: #{tpu_custom_call.1} parent=1 // pred_fallthru
      _
    %172 = vsyncpa [#allocation3], 1
    %173 = vsyncpa [#allocation6], 1
    %174 = vsyncpa [#allocation4], 1

</llo_original>
